<compile_context>
chip_gen: v5e
topology: v5e:2x2
jax: 0.10.0
libtpu: 0.0.40
codegen_flags: <defaults>
</compile_context>

<pallas_src>
from functools import partial

import numpy as np
import jax
import jax.numpy as jnp
from jax.experimental import pallas as pl
from jax.experimental.pallas import tpu as pltpu


def _residual_block_kernel(x_ref, w1_ref, b1_ref, w2_ref, b2_ref, o_ref,
                           xpad_ref, *, num_units, H, W, C):
    """Runs `num_units` BasicBlocks on one image held as an (H, W*C) slab."""
    WC = W * C
    # Zero the padded scratch once per image; only the interior is rewritten
    # below, so the 1-pixel halo stays zero for every conv of every unit.
    xpad_ref[...] = jnp.zeros_like(xpad_ref)

    cur = x_ref[0].astype(jnp.float32)                       # (H, W*C)

    for u in range(num_units):                               # static unroll
        skip = cur

        # ---- conv1 (BN1 folded into weights) + ReLU --------------------
        xpad_ref[1:H + 1, C:C + WC] = cur
        acc = jnp.zeros((H, WC), jnp.float32)
        for dh in range(3):                                  # 3 banded matmuls
            acc += jnp.dot(xpad_ref[dh:dh + H, :], w1_ref[u, dh],
                           preferred_element_type=jnp.float32)
        h = jnp.maximum(acc + b1_ref[u], 0.0)

        # ---- conv2 (BN2 folded) + identity skip + ReLU ------------------
        xpad_ref[1:H + 1, C:C + WC] = h
        acc = jnp.zeros((H, WC), jnp.float32)
        for dh in range(3):
            acc += jnp.dot(xpad_ref[dh:dh + H, :], w2_ref[u, dh],
                           preferred_element_type=jnp.float32)
        cur = jnp.maximum(acc + b2_ref[u] + skip, 0.0)

    o_ref[0] = cur.astype(o_ref.dtype)


def _bn_fold(w, gamma, beta, mean, var, eps=1e-5):
    """Fold inference BatchNorm into the conv: conv(x, w*s) + (beta - mean*s)."""
    s = gamma / jnp.sqrt(var + eps)                          # (Cout,)
    return w * s, beta - mean * s                            # scale broadcasts on Cout


def _band_weights(w_eff, W):
    """(3,3,Cin,Cout) -> (3, (W+2)*Cin, W*Cout): one banded matrix per vertical
    tap dh, so the 3x3 conv over an (H, W*C) slab becomes 3 lane-dense matmuls."""
    Cin, Cout = w_eff.shape[2], w_eff.shape[3]
    M = np.zeros((3, W + 2, W), np.float32)                  # placement: w_in = w_out + dw
    for dw in range(3):
        M[dw, np.arange(W) + dw, np.arange(W)] = 1.0
    band = jnp.einsum('drc,hdio->hrico', jnp.asarray(M), w_eff)
    return band.reshape(3, (W + 2) * Cin, W * Cout)


def init_residual_params(key, in_channel, out_channel):
    ks = jax.random.split(key, 10)
    std1 = 1.0 / jnp.sqrt(9.0 * in_channel)
    std2 = 1.0 / jnp.sqrt(9.0 * out_channel)

    def u(k, lo, hi):
        return jax.random.uniform(k, (out_channel,), jnp.float32, lo, hi)

    return {
        "w1": jax.random.normal(ks[0], (3, 3, in_channel, out_channel), jnp.float32) * std1,
        "w2": jax.random.normal(ks[1], (3, 3, out_channel, out_channel), jnp.float32) * std2,
        "g1": u(ks[2], 0.5, 1.5), "b1": u(ks[3], -0.5, 0.5),
        "m1": u(ks[4], -0.5, 0.5), "v1": u(ks[5], 0.5, 1.5),
        "g2": u(ks[6], 0.5, 1.5), "b2": u(ks[7], -0.5, 0.5),
        "m2": u(ks[8], -0.5, 0.5), "v2": u(ks[9], 0.5, 1.5),
    }


def residual_block_forward(x_nchw, params_list):
    """residual_block.forward: x = input_; for r in residuals: x = r(x)."""
    N, C, H, W = x_nchw.shape
    U = len(params_list)
    if U == 0:
        # TODO(synk): upstream forward() would raise NameError for resNumber=0.
        return x_nchw

    # NCHW -> NHWC -> lane-dense (N, H, W*C) slabs (contiguous, free reshape).
    x2d = jnp.transpose(x_nchw, (0, 2, 3, 1)).reshape(N, H, W * C)

    w1b, b1b, w2b, b2b = [], [], [], []
    for p in params_list:
        w1e, bias1 = _bn_fold(p["w1"], p["g1"], p["b1"], p["m1"], p["v1"])
        w2e, bias2 = _bn_fold(p["w2"], p["g2"], p["b2"], p["m2"], p["v2"])
        w1b.append(_band_weights(w1e, W))
        w2b.append(_band_weights(w2e, W))
        b1b.append(jnp.tile(bias1, W)[None, :])              # (1, W*Cout) lane layout
        b2b.append(jnp.tile(bias2, W)[None, :])
    w1b, w2b = jnp.stack(w1b), jnp.stack(w2b)                # (U, 3, (W+2)*C, W*C)
    b1b, b2b = jnp.stack(b1b), jnp.stack(b2b)                # (U, 1, W*C)

    Kp, WC = (W + 2) * C, W * C
    kernel = partial(_residual_block_kernel, num_units=U, H=H, W=W, C=C)

    def resident(shape):                                     # whole array, VMEM-resident
        return pl.BlockSpec(shape, lambda n: (0,) * len(shape))

    out2d = pl.pallas_call(
        kernel,
        out_shape=jax.ShapeDtypeStruct((N, H, WC), x_nchw.dtype),
        grid=(N,),
        in_specs=[
            pl.BlockSpec((1, H, WC), lambda n: (n, 0, 0)),   # per-image input slab
            resident((U, 3, Kp, WC)),
            resident((U, 1, WC)),
            resident((U, 3, Kp, WC)),
            resident((U, 1, WC)),
        ],
        out_specs=pl.BlockSpec((1, H, WC), lambda n: (n, 0, 0)),
        scratch_shapes=[pltpu.VMEM((H + 2, (W + 2) * C), jnp.float32)],
        compiler_params=pltpu.CompilerParams(
            dimension_semantics=("parallel",),
            vmem_limit_bytes=32 * 1024 * 1024),
    )(x2d, w1b, b1b, w2b, b2b)

    return jnp.transpose(out2d.reshape(N, H, W, C), (0, 3, 1, 2))


def _reference_forward(x_nchw, params_list, eps=1e-5):
    """Plain-JAX reference (inference BN, identity skip) for a sanity check."""
    x = jnp.transpose(x_nchw, (0, 2, 3, 1))
    dn = ('NHWC', 'HWIO', 'NHWC')

    def conv_bn(z, w, g, b, m, v):
        y = jax.lax.conv_general_dilated(z, w, (1, 1), 'SAME',
                                         dimension_numbers=dn,
                                         precision=jax.lax.Precision.HIGHEST)
        s = g / jnp.sqrt(v + eps)
        return y * s + (b - m * s)

    for p in params_list:
        h = jnp.maximum(conv_bn(x, p["w1"], p["g1"], p["b1"], p["m1"], p["v1"]), 0.0)
        x = jnp.maximum(conv_bn(h, p["w2"], p["g2"], p["b2"], p["m2"], p["v2"]) + x, 0.0)
    return jnp.transpose(x, (0, 3, 1, 2))


if __name__ == "__main__":
    N, C, H, W = 2, 4, 16, 16
    in_channel = out_channel = C
    res_number = 2                       # downsample=None -> identity skip

    key = jax.random.PRNGKey(0)
    kx, *kps = jax.random.split(key, 1 + res_number)
    x = jax.random.normal(kx, (N, C, H, W), jnp.float32)
    params_list = [init_residual_params(k, in_channel, out_channel) for k in kps]

    out = jax.block_until_ready(residual_block_forward(x, params_list))
    assert out.shape == (N, out_channel, H, W)
    assert bool(jnp.all(jnp.isfinite(out)))

    ref = jax.block_until_ready(_reference_forward(x, params_list))
    err = float(jnp.max(jnp.abs(out - ref)))
    assert err < 5e-2, f"max abs error vs reference: {err}"

    print("KERNEL_OK")
</pallas_src>

<mosaic_0001>
module attributes {stable_mosaic.version = 11 : i64} {
  func.func @_residual_block_kernel(%arg0: i32, %arg1: memref<1x16x64xf32, #tpu.memory_space<vmem>>, %arg2: memref<2x3x72x64xf32, #tpu.memory_space<vmem>>, %arg3: memref<2x1x64xf32, #tpu.memory_space<vmem>>, %arg4: memref<2x3x72x64xf32, #tpu.memory_space<vmem>>, %arg5: memref<2x1x64xf32, #tpu.memory_space<vmem>>, %arg6: memref<1x16x64xf32, #tpu.memory_space<vmem>>, %arg7: memref<18x72xf32, #tpu.memory_space<vmem>>) attributes {dimension_semantics = [#tpu.dimension_semantics<parallel>], iteration_bounds = array<i64: 2>, scalar_prefetch = 0 : i64, scratch_operands = 1 : i64, tpu.core_type = #tpu.core_type<tc>, window_params = [{transform_indices = @transform_0, window_bounds = array<i64: 1, 16, 64>}, {pipeline_mode = #tpu.pipeline_mode<synchronous>, transform_indices = @transform_1, window_bounds = array<i64: 2, 3, 72, 64>}, {pipeline_mode = #tpu.pipeline_mode<synchronous>, transform_indices = @transform_2, window_bounds = array<i64: 2, 1, 64>}, {pipeline_mode = #tpu.pipeline_mode<synchronous>, transform_indices = @transform_3, window_bounds = array<i64: 2, 3, 72, 64>}, {pipeline_mode = #tpu.pipeline_mode<synchronous>, transform_indices = @transform_4, window_bounds = array<i64: 2, 1, 64>}, {transform_indices = @transform_5, window_bounds = array<i64: 1, 16, 64>}]} {
    %cst = arith.constant 0.000000e+00 : f32
    %0 = vector.broadcast %cst : f32 to vector<18x72xf32>
    %c0 = arith.constant 0 : index
    %c0_0 = arith.constant 0 : index
    %1 = vector.load %arg7[%c0, %c0_0] : memref<18x72xf32, #tpu.memory_space<vmem>>, vector<18x72xf32>
    tpu.vector_store %arg7[%c0, %c0_0], %0 {strides = array<i32>} : memref<18x72xf32, #tpu.memory_space<vmem>>, vector<18x72xf32>,
    %c0_1 = arith.constant 0 : index
    %c0_2 = arith.constant 0 : index
    %c0_3 = arith.constant 0 : index
    %2 = vector.load %arg1[%c0_1, %c0_2, %c0_3] : memref<1x16x64xf32, #tpu.memory_space<vmem>>, vector<1x16x64xf32>
    %3 = vector.shape_cast %2 : vector<1x16x64xf32> to vector<16x64xf32>
    %c1 = arith.constant 1 : index
    %c4 = arith.constant 4 : index
    %4 = vector.load %arg7[%c1, %c4] : memref<18x72xf32, #tpu.memory_space<vmem>>, vector<16x64xf32>
    tpu.vector_store %arg7[%c1, %c4], %3 {strides = array<i32>} : memref<18x72xf32, #tpu.memory_space<vmem>>, vector<16x64xf32>,
    %cst_4 = arith.constant 0.000000e+00 : f32
    %5 = vector.broadcast %cst_4 : f32 to vector<16x64xf32>
    %c0_5 = arith.constant 0 : index
    %c0_6 = arith.constant 0 : index
    %6 = vector.load %arg7[%c0_5, %c0_6] : memref<18x72xf32, #tpu.memory_space<vmem>>, vector<16x72xf32>
    %c0_7 = arith.constant 0 : index
    %c0_8 = arith.constant 0 : index
    %c0_9 = arith.constant 0 : index
    %c0_10 = arith.constant 0 : index
    %7 = vector.load %arg2[%c0_7, %c0_8, %c0_9, %c0_10] : memref<2x3x72x64xf32, #tpu.memory_space<vmem>>, vector<1x1x72x64xf32>
    %8 = vector.shape_cast %7 : vector<1x1x72x64xf32> to vector<72x64xf32>
    %cst_11 = arith.constant dense<0.000000e+00> : vector<16x64xf32>
    %9 = tpu.matmul %6, %8, %cst_11 {dimension_numbers = #tpu.dot_dimension_numbers<[1], [0], [0], [1], [0, 0, 1, 1], [], []>} : vector<16x72xf32>, vector<72x64xf32>, vector<16x64xf32> -> vector<16x64xf32>
    %10 = arith.addf %5, %9 : vector<16x64xf32>
    %c1_12 = arith.constant 1 : index
    %c0_13 = arith.constant 0 : index
    %11 = vector.load %arg7[%c1_12, %c0_13] : memref<18x72xf32, #tpu.memory_space<vmem>>, vector<16x72xf32>
    %c0_14 = arith.constant 0 : index
    %c1_15 = arith.constant 1 : index
    %c0_16 = arith.constant 0 : index
    %c0_17 = arith.constant 0 : index
    %12 = vector.load %arg2[%c0_14, %c1_15, %c0_16, %c0_17] : memref<2x3x72x64xf32, #tpu.memory_space<vmem>>, vector<1x1x72x64xf32>
    %13 = vector.shape_cast %12 : vector<1x1x72x64xf32> to vector<72x64xf32>
    %cst_18 = arith.constant dense<0.000000e+00> : vector<16x64xf32>
    %14 = tpu.matmul %11, %13, %cst_18 {dimension_numbers = #tpu.dot_dimension_numbers<[1], [0], [0], [1], [0, 0, 1, 1], [], []>} : vector<16x72xf32>, vector<72x64xf32>, vector<16x64xf32> -> vector<16x64xf32>
    %15 = arith.addf %10, %14 : vector<16x64xf32>
    %c2 = arith.constant 2 : index
    %c0_19 = arith.constant 0 : index
    %16 = vector.load %arg7[%c2, %c0_19] : memref<18x72xf32, #tpu.memory_space<vmem>>, vector<16x72xf32>
    %c0_20 = arith.constant 0 : index
    %c2_21 = arith.constant 2 : index
    %c0_22 = arith.constant 0 : index
    %c0_23 = arith.constant 0 : index
    %17 = vector.load %arg2[%c0_20, %c2_21, %c0_22, %c0_23] : memref<2x3x72x64xf32, #tpu.memory_space<vmem>>, vector<1x1x72x64xf32>
    %18 = vector.shape_cast %17 : vector<1x1x72x64xf32> to vector<72x64xf32>
    %cst_24 = arith.constant dense<0.000000e+00> : vector<16x64xf32>
    %19 = tpu.matmul %16, %18, %cst_24 {dimension_numbers = #tpu.dot_dimension_numbers<[1], [0], [0], [1], [0, 0, 1, 1], [], []>} : vector<16x72xf32>, vector<72x64xf32>, vector<16x64xf32> -> vector<16x64xf32>
    %20 = arith.addf %15, %19 : vector<16x64xf32>
    %c0_25 = arith.constant 0 : index
    %c0_26 = arith.constant 0 : index
    %c0_27 = arith.constant 0 : index
    %21 = vector.load %arg3[%c0_25, %c0_26, %c0_27] : memref<2x1x64xf32, #tpu.memory_space<vmem>>, vector<1x1x64xf32>
    %22 = vector.shape_cast %21 : vector<1x1x64xf32> to vector<1x64xf32>
    %23 = vector.broadcast %22 : vector<1x64xf32> to vector<16x64xf32>
    %24 = arith.addf %20, %23 : vector<16x64xf32>
    %cst_28 = arith.constant 0.000000e+00 : f32
    %25 = vector.broadcast %cst_28 : f32 to vector<16x64xf32>
    %26 = arith.maximumf %24, %25 : vector<16x64xf32>
    %c1_29 = arith.constant 1 : index
    %c4_30 = arith.constant 4 : index
    %27 = vector.load %arg7[%c1_29, %c4_30] : memref<18x72xf32, #tpu.memory_space<vmem>>, vector<16x64xf32>
    tpu.vector_store %arg7[%c1_29, %c4_30], %26 {strides = array<i32>} : memref<18x72xf32, #tpu.memory_space<vmem>>, vector<16x64xf32>,
    %cst_31 = arith.constant 0.000000e+00 : f32
    %28 = vector.broadcast %cst_31 : f32 to vector<16x64xf32>
    %c0_32 = arith.constant 0 : index
    %c0_33 = arith.constant 0 : index
    %29 = vector.load %arg7[%c0_32, %c0_33] : memref<18x72xf32, #tpu.memory_space<vmem>>, vector<16x72xf32>
    %c0_34 = arith.constant 0 : index
    %c0_35 = arith.constant 0 : index
    %c0_36 = arith.constant 0 : index
    %c0_37 = arith.constant 0 : index
    %30 = vector.load %arg4[%c0_34, %c0_35, %c0_36, %c0_37] : memref<2x3x72x64xf32, #tpu.memory_space<vmem>>, vector<1x1x72x64xf32>
    %31 = vector.shape_cast %30 : vector<1x1x72x64xf32> to vector<72x64xf32>
    %cst_38 = arith.constant dense<0.000000e+00> : vector<16x64xf32>
    %32 = tpu.matmul %29, %31, %cst_38 {dimension_numbers = #tpu.dot_dimension_numbers<[1], [0], [0], [1], [0, 0, 1, 1], [], []>} : vector<16x72xf32>, vector<72x64xf32>, vector<16x64xf32> -> vector<16x64xf32>
    %33 = arith.addf %28, %32 : vector<16x64xf32>
    %c1_39 = arith.constant 1 : index
    %c0_40 = arith.constant 0 : index
    %34 = vector.load %arg7[%c1_39, %c0_40] : memref<18x72xf32, #tpu.memory_space<vmem>>, vector<16x72xf32>
    %c0_41 = arith.constant 0 : index
    %c1_42 = arith.constant 1 : index
    %c0_43 = arith.constant 0 : index
    %c0_44 = arith.constant 0 : index
    %35 = vector.load %arg4[%c0_41, %c1_42, %c0_43, %c0_44] : memref<2x3x72x64xf32, #tpu.memory_space<vmem>>, vector<1x1x72x64xf32>
    %36 = vector.shape_cast %35 : vector<1x1x72x64xf32> to vector<72x64xf32>
    %cst_45 = arith.constant dense<0.000000e+00> : vector<16x64xf32>
    %37 = tpu.matmul %34, %36, %cst_45 {dimension_numbers = #tpu.dot_dimension_numbers<[1], [0], [0], [1], [0, 0, 1, 1], [], []>} : vector<16x72xf32>, vector<72x64xf32>, vector<16x64xf32> -> vector<16x64xf32>
    %38 = arith.addf %33, %37 : vector<16x64xf32>
    %c2_46 = arith.constant 2 : index
    %c0_47 = arith.constant 0 : index
    %39 = vector.load %arg7[%c2_46, %c0_47] : memref<18x72xf32, #tpu.memory_space<vmem>>, vector<16x72xf32>
    %c0_48 = arith.constant 0 : index
    %c2_49 = arith.constant 2 : index
    %c0_50 = arith.constant 0 : index
    %c0_51 = arith.constant 0 : index
    %40 = vector.load %arg4[%c0_48, %c2_49, %c0_50, %c0_51] : memref<2x3x72x64xf32, #tpu.memory_space<vmem>>, vector<1x1x72x64xf32>
    %41 = vector.shape_cast %40 : vector<1x1x72x64xf32> to vector<72x64xf32>
    %cst_52 = arith.constant dense<0.000000e+00> : vector<16x64xf32>
    %42 = tpu.matmul %39, %41, %cst_52 {dimension_numbers = #tpu.dot_dimension_numbers<[1], [0], [0], [1], [0, 0, 1, 1], [], []>} : vector<16x72xf32>, vector<72x64xf32>, vector<16x64xf32> -> vector<16x64xf32>
    %43 = arith.addf %38, %42 : vector<16x64xf32>
    %c0_53 = arith.constant 0 : index
    %c0_54 = arith.constant 0 : index
    %c0_55 = arith.constant 0 : index
    %44 = vector.load %arg5[%c0_53, %c0_54, %c0_55] : memref<2x1x64xf32, #tpu.memory_space<vmem>>, vector<1x1x64xf32>
    %45 = vector.shape_cast %44 : vector<1x1x64xf32> to vector<1x64xf32>
    %46 = vector.broadcast %45 : vector<1x64xf32> to vector<16x64xf32>
    %47 = arith.addf %43, %46 : vector<16x64xf32>
    %48 = arith.addf %47, %3 : vector<16x64xf32>
    %cst_56 = arith.constant 0.000000e+00 : f32
    %49 = vector.broadcast %cst_56 : f32 to vector<16x64xf32>
    %50 = arith.maximumf %48, %49 : vector<16x64xf32>
    %c1_57 = arith.constant 1 : index
    %c4_58 = arith.constant 4 : index
    %51 = vector.load %arg7[%c1_57, %c4_58] : memref<18x72xf32, #tpu.memory_space<vmem>>, vector<16x64xf32>
    tpu.vector_store %arg7[%c1_57, %c4_58], %50 {strides = array<i32>} : memref<18x72xf32, #tpu.memory_space<vmem>>, vector<16x64xf32>,
    %cst_59 = arith.constant 0.000000e+00 : f32
    %52 = vector.broadcast %cst_59 : f32 to vector<16x64xf32>
    %c0_60 = arith.constant 0 : index
    %c0_61 = arith.constant 0 : index
    %53 = vector.load %arg7[%c0_60, %c0_61] : memref<18x72xf32, #tpu.memory_space<vmem>>, vector<16x72xf32>
    %c1_62 = arith.constant 1 : index
    %c0_63 = arith.constant 0 : index
    %c0_64 = arith.constant 0 : index
    %c0_65 = arith.constant 0 : index
    %54 = vector.load %arg2[%c1_62, %c0_63, %c0_64, %c0_65] : memref<2x3x72x64xf32, #tpu.memory_space<vmem>>, vector<1x1x72x64xf32>
    %55 = vector.shape_cast %54 : vector<1x1x72x64xf32> to vector<72x64xf32>
    %cst_66 = arith.constant dense<0.000000e+00> : vector<16x64xf32>
    %56 = tpu.matmul %53, %55, %cst_66 {dimension_numbers = #tpu.dot_dimension_numbers<[1], [0], [0], [1], [0, 0, 1, 1], [], []>} : vector<16x72xf32>, vector<72x64xf32>, vector<16x64xf32> -> vector<16x64xf32>
    %57 = arith.addf %52, %56 : vector<16x64xf32>
    %c1_67 = arith.constant 1 : index
    %c0_68 = arith.constant 0 : index
    %58 = vector.load %arg7[%c1_67, %c0_68] : memref<18x72xf32, #tpu.memory_space<vmem>>, vector<16x72xf32>
    %c1_69 = arith.constant 1 : index
    %c1_70 = arith.constant 1 : index
    %c0_71 = arith.constant 0 : index
    %c0_72 = arith.constant 0 : index
    %59 = vector.load %arg2[%c1_69, %c1_70, %c0_71, %c0_72] : memref<2x3x72x64xf32, #tpu.memory_space<vmem>>, vector<1x1x72x64xf32>
    %60 = vector.shape_cast %59 : vector<1x1x72x64xf32> to vector<72x64xf32>
    %cst_73 = arith.constant dense<0.000000e+00> : vector<16x64xf32>
    %61 = tpu.matmul %58, %60, %cst_73 {dimension_numbers = #tpu.dot_dimension_numbers<[1], [0], [0], [1], [0, 0, 1, 1], [], []>} : vector<16x72xf32>, vector<72x64xf32>, vector<16x64xf32> -> vector<16x64xf32>
    %62 = arith.addf %57, %61 : vector<16x64xf32>
    %c2_74 = arith.constant 2 : index
    %c0_75 = arith.constant 0 : index
    %63 = vector.load %arg7[%c2_74, %c0_75] : memref<18x72xf32, #tpu.memory_space<vmem>>, vector<16x72xf32>
    %c1_76 = arith.constant 1 : index
    %c2_77 = arith.constant 2 : index
    %c0_78 = arith.constant 0 : index
    %c0_79 = arith.constant 0 : index
    %64 = vector.load %arg2[%c1_76, %c2_77, %c0_78, %c0_79] : memref<2x3x72x64xf32, #tpu.memory_space<vmem>>, vector<1x1x72x64xf32>
    %65 = vector.shape_cast %64 : vector<1x1x72x64xf32> to vector<72x64xf32>
    %cst_80 = arith.constant dense<0.000000e+00> : vector<16x64xf32>
    %66 = tpu.matmul %63, %65, %cst_80 {dimension_numbers = #tpu.dot_dimension_numbers<[1], [0], [0], [1], [0, 0, 1, 1], [], []>} : vector<16x72xf32>, vector<72x64xf32>, vector<16x64xf32> -> vector<16x64xf32>
    %67 = arith.addf %62, %66 : vector<16x64xf32>
    %c1_81 = arith.constant 1 : index
    %c0_82 = arith.constant 0 : index
    %c0_83 = arith.constant 0 : index
    %68 = vector.load %arg3[%c1_81, %c0_82, %c0_83] : memref<2x1x64xf32, #tpu.memory_space<vmem>>, vector<1x1x64xf32>
    %69 = vector.shape_cast %68 : vector<1x1x64xf32> to vector<1x64xf32>
    %70 = vector.broadcast %69 : vector<1x64xf32> to vector<16x64xf32>
    %71 = arith.addf %67, %70 : vector<16x64xf32>
    %cst_84 = arith.constant 0.000000e+00 : f32
    %72 = vector.broadcast %cst_84 : f32 to vector<16x64xf32>
    %73 = arith.maximumf %71, %72 : vector<16x64xf32>
    %c1_85 = arith.constant 1 : index
    %c4_86 = arith.constant 4 : index
    %74 = vector.load %arg7[%c1_85, %c4_86] : memref<18x72xf32, #tpu.memory_space<vmem>>, vector<16x64xf32>
    tpu.vector_store %arg7[%c1_85, %c4_86], %73 {strides = array<i32>} : memref<18x72xf32, #tpu.memory_space<vmem>>, vector<16x64xf32>,
    %cst_87 = arith.constant 0.000000e+00 : f32
    %75 = vector.broadcast %cst_87 : f32 to vector<16x64xf32>
    %c0_88 = arith.constant 0 : index
    %c0_89 = arith.constant 0 : index
    %76 = vector.load %arg7[%c0_88, %c0_89] : memref<18x72xf32, #tpu.memory_space<vmem>>, vector<16x72xf32>
    %c1_90 = arith.constant 1 : index
    %c0_91 = arith.constant 0 : index
    %c0_92 = arith.constant 0 : index
    %c0_93 = arith.constant 0 : index
    %77 = vector.load %arg4[%c1_90, %c0_91, %c0_92, %c0_93] : memref<2x3x72x64xf32, #tpu.memory_space<vmem>>, vector<1x1x72x64xf32>
    %78 = vector.shape_cast %77 : vector<1x1x72x64xf32> to vector<72x64xf32>
    %cst_94 = arith.constant dense<0.000000e+00> : vector<16x64xf32>
    %79 = tpu.matmul %76, %78, %cst_94 {dimension_numbers = #tpu.dot_dimension_numbers<[1], [0], [0], [1], [0, 0, 1, 1], [], []>} : vector<16x72xf32>, vector<72x64xf32>, vector<16x64xf32> -> vector<16x64xf32>
    %80 = arith.addf %75, %79 : vector<16x64xf32>
    %c1_95 = arith.constant 1 : index
    %c0_96 = arith.constant 0 : index
    %81 = vector.load %arg7[%c1_95, %c0_96] : memref<18x72xf32, #tpu.memory_space<vmem>>, vector<16x72xf32>
    %c1_97 = arith.constant 1 : index
    %c1_98 = arith.constant 1 : index
    %c0_99 = arith.constant 0 : index
    %c0_100 = arith.constant 0 : index
    %82 = vector.load %arg4[%c1_97, %c1_98, %c0_99, %c0_100] : memref<2x3x72x64xf32, #tpu.memory_space<vmem>>, vector<1x1x72x64xf32>
    %83 = vector.shape_cast %82 : vector<1x1x72x64xf32> to vector<72x64xf32>
    %cst_101 = arith.constant dense<0.000000e+00> : vector<16x64xf32>
    %84 = tpu.matmul %81, %83, %cst_101 {dimension_numbers = #tpu.dot_dimension_numbers<[1], [0], [0], [1], [0, 0, 1, 1], [], []>} : vector<16x72xf32>, vector<72x64xf32>, vector<16x64xf32> -> vector<16x64xf32>
    %85 = arith.addf %80, %84 : vector<16x64xf32>
    %c2_102 = arith.constant 2 : index
    %c0_103 = arith.constant 0 : index
    %86 = vector.load %arg7[%c2_102, %c0_103] : memref<18x72xf32, #tpu.memory_space<vmem>>, vector<16x72xf32>
    %c1_104 = arith.constant 1 : index
    %c2_105 = arith.constant 2 : index
    %c0_106 = arith.constant 0 : index
    %c0_107 = arith.constant 0 : index
    %87 = vector.load %arg4[%c1_104, %c2_105, %c0_106, %c0_107] : memref<2x3x72x64xf32, #tpu.memory_space<vmem>>, vector<1x1x72x64xf32>
    %88 = vector.shape_cast %87 : vector<1x1x72x64xf32> to vector<72x64xf32>
    %cst_108 = arith.constant dense<0.000000e+00> : vector<16x64xf32>
    %89 = tpu.matmul %86, %88, %cst_108 {dimension_numbers = #tpu.dot_dimension_numbers<[1], [0], [0], [1], [0, 0, 1, 1], [], []>} : vector<16x72xf32>, vector<72x64xf32>, vector<16x64xf32> -> vector<16x64xf32>
    %90 = arith.addf %85, %89 : vector<16x64xf32>
    %c1_109 = arith.constant 1 : index
    %c0_110 = arith.constant 0 : index
    %c0_111 = arith.constant 0 : index
    %91 = vector.load %arg5[%c1_109, %c0_110, %c0_111] : memref<2x1x64xf32, #tpu.memory_space<vmem>>, vector<1x1x64xf32>
    %92 = vector.shape_cast %91 : vector<1x1x64xf32> to vector<1x64xf32>
    %93 = vector.broadcast %92 : vector<1x64xf32> to vector<16x64xf32>
    %94 = arith.addf %90, %93 : vector<16x64xf32>
    %95 = arith.addf %94, %50 : vector<16x64xf32>
    %cst_112 = arith.constant 0.000000e+00 : f32
    %96 = vector.broadcast %cst_112 : f32 to vector<16x64xf32>
    %97 = arith.maximumf %95, %96 : vector<16x64xf32>
    %c0_113 = arith.constant 0 : index
    %c0_114 = arith.constant 0 : index
    %c0_115 = arith.constant 0 : index
    %98 = vector.load %arg6[%c0_113, %c0_114, %c0_115] : memref<1x16x64xf32, #tpu.memory_space<vmem>>, vector<1x16x64xf32>
    %99 = vector.shape_cast %98 : vector<1x16x64xf32> to vector<16x64xf32>
    %100 = vector.shape_cast %97 : vector<16x64xf32> to vector<1x16x64xf32>
    tpu.vector_store %arg6[%c0_113, %c0_114, %c0_115], %100 {strides = array<i32>} : memref<1x16x64xf32, #tpu.memory_space<vmem>>, vector<1x16x64xf32>,
    return
  }
  func.func @transform_0(%arg0: i32) -> (i32, i32, i32) {
    %c0_i32 = arith.constant 0 : i32
    %c0_i32_0 = arith.constant 0 : i32
    %c0_i32_1 = arith.constant 0 : i32
    return %arg0, %c0_i32, %c0_i32_0 : i32, i32, i32
  }
  func.func @transform_1(%arg0: i32) -> (i32, i32, i32, i32) {
    %c0_i32 = arith.constant 0 : i32
    %c0_i32_0 = arith.constant 0 : i32
    %c0_i32_1 = arith.constant 0 : i32
    %c0_i32_2 = arith.constant 0 : i32
    %c0_i32_3 = arith.constant 0 : i32
    return %c0_i32, %c0_i32_0, %c0_i32_1, %c0_i32_2 : i32, i32, i32, i32
  }
  func.func @transform_2(%arg0: i32) -> (i32, i32, i32) {
    %c0_i32 = arith.constant 0 : i32
    %c0_i32_0 = arith.constant 0 : i32
    %c0_i32_1 = arith.constant 0 : i32
    %c0_i32_2 = arith.constant 0 : i32
    return %c0_i32, %c0_i32_0, %c0_i32_1 : i32, i32, i32
  }
  func.func @transform_3(%arg0: i32) -> (i32, i32, i32, i32) {
    %c0_i32 = arith.constant 0 : i32
    %c0_i32_0 = arith.constant 0 : i32
    %c0_i32_1 = arith.constant 0 : i32
    %c0_i32_2 = arith.constant 0 : i32
    %c0_i32_3 = arith.constant 0 : i32
    return %c0_i32, %c0_i32_0, %c0_i32_1, %c0_i32_2 : i32, i32, i32, i32
  }
  func.func @transform_4(%arg0: i32) -> (i32, i32, i32) {
    %c0_i32 = arith.constant 0 : i32
    %c0_i32_0 = arith.constant 0 : i32
    %c0_i32_1 = arith.constant 0 : i32
    %c0_i32_2 = arith.constant 0 : i32
    return %c0_i32, %c0_i32_0, %c0_i32_1 : i32, i32, i32
  }
  func.func @transform_5(%arg0: i32) -> (i32, i32, i32) {
    %c0_i32 = arith.constant 0 : i32
    %c0_i32_0 = arith.constant 0 : i32
    %c0_i32_1 = arith.constant 0 : i32
    return %arg0, %c0_i32, %c0_i32_0 : i32, i32, i32
  }
}

</mosaic_0001>

<llo_original>
// kernel: tpu_custom_call.1
$region0: #{tpu_custom_call.1}
  #allocation0 [shape = 'u32[]', space=smem, size = 0x4, offset = 0x4, fixed_abs, tag = 'smem constant byte address 0x4 - core index']
  #allocation1 [shape = 'u32[72,128]{1,0:T(1,128)}', space=vmem, size = 0x9000, scoped, tag = 'internal scratch']
  #allocation2 [shape = 'f32[18,72]{1,0:T(8,128)}', space=vmem, size = 0x3000, scoped, tag = 'scratch operand']
  %s0 = inlined_call_operand.vmem [shape: f32[2,16,64], index: 0, kind: input, shape index: {}]
  %s1 = inlined_call_operand.vmem [shape: f32[2,3,72,64], index: 1, kind: input, shape index: {}]
  %s2 = inlined_call_operand.vmem [shape: f32[2,1,64], index: 2, kind: input, shape index: {}]
  %s3 = inlined_call_operand.vmem [shape: f32[2,3,72,64], index: 3, kind: input, shape index: {}]
  %s4 = inlined_call_operand.vmem [shape: f32[2,1,64], index: 4, kind: input, shape index: {}]
  %s5 = inlined_call_operand.hbm [shape: f32[2,16,64], index: 5, kind: output, shape index: {}]
  %s6 = sld [smem:[#allocation0]]
  $region53: #{tpu_custom_call.1} parent=0
    _
  %s8 = ssub.s32 1, %s6
  %s9 = scalar_select 0, %s8, %s6
  $region1: #{tpu_custom_call.1} parent=0
    #allocation3 [shape = 'u8[16384]{0}', space=vmem, size = 0x4000, scoped, tag = 'output window, operand 0']
    #allocation4 [shape = 's32[2]{0}', space=sflag, size = 0x8, scoped, tag = 'scoped memory for tpu_custom_call.1']
    %10 = vsyncpa [#allocation4], 0
    %s11 = scalar_lea.sflag [#allocation4], 1
    %12 = vsyncpa %s11, 0
    loop: start=0, step=1, limit=4
    $region2: #{tpu_custom_call.1} parent=1 // loop_pre_header
      _
    $region3: #{tpu_custom_call.1} parent=1 // loop_header
      %s14 = sphi 0, %s18
      %p15 = scmp.ge.s32.totalorder %s14, 4
      %s24 = sphi 0, %s26
      %s27 = sphi 0, %s24
      %s28 = sphi 0, %s27
      %s44 = sphi 0, %s28
      %s48 = sphi 0, %s48
      %s50 = sphi 0, %s48
      %s51 = sphi 0, %s50
      %s65 = sphi 0, %s51
      %s69 = sphi 0, %s69
      %s71 = sphi 0, %s69
      %s72 = sphi 0, %s71
      %s86 = sphi 0, %s72
      %s90 = sphi 0, %s90
      %s92 = sphi 0, %s90
      %s93 = sphi 0, %s92
      %s107 = sphi 0, %s93
      %s111 = sphi 0, %s111
      %s113 = sphi 0, %s111
      %s114 = sphi 0, %s113
      %s128 = sphi 0, %s114
      %s134 = sphi 0, %s136
      %s137 = sphi 0, %s134
      %s138 = sphi 0, %s137
      %s154 = sphi 0, %s138
    $region4: #{tpu_custom_call.1} parent=1 // loop_header_branch
      %17 = sbr.rel (%p15) target = $region8
    $region5: #{tpu_custom_call.1} parent=1 // loop_body
      %s19 = ssub.s32 %s14, 1
      %s20 = ssub.s32 %s14, 2
      %s21 = sadd.s32 %s14, 1
      %s22 = ssub.s32 %s14, %s21
      %p23 = scmp.eq.s32.totalorder %s22, 0
      %s25 = sadd.s32 %s24, 1
      %s26 = scalar_select %p23, %s24, %s25
      %p29 = pneg %p23
      %p30 = scmp.eq.s32.totalorder %s14, 1
      %p31 = por %p29, %p30
      %p32 = scmp.ne.s32.totalorder %s24, %s27
      %p33 = scmp.eq.s32.totalorder %s14, 0
      %p34 = por %p32, %p33
      %p35 = scmp.ne.s32.totalorder %s24, %s27
      %p36 = scmp.eq.s32.totalorder %s19, 1
      %p37 = por %p35, %p36
      %p38 = scmp.ne.s32.totalorder %s27, %s28
      %p39 = scmp.eq.s32.totalorder %s19, 0
      %p40 = por %p38, %p39
      %p41 = scmp.ne.s32.totalorder %s27, %s28
      %p42 = scmp.eq.s32.totalorder %s20, 1
      %p43 = por %p41, %p42
      %p45 = scmp.ne.s32.totalorder %s28, %s44
      %p46 = scmp.eq.s32.totalorder %s20, 0
      %p47 = por %p45, %p46
      %s49 = sadd.s32 %s48, 1
      %p52 = scmp.eq.s32.totalorder %s14, 1
      %p53 = scmp.ne.s32.totalorder %s48, %s50
      %p54 = scmp.eq.s32.totalorder %s14, 0
      %p55 = por %p53, %p54
      %p56 = scmp.ne.s32.totalorder %s48, %s50
      %p57 = scmp.eq.s32.totalorder %s19, 1
      %p58 = por %p56, %p57
      %p59 = scmp.ne.s32.totalorder %s50, %s51
      %p60 = scmp.eq.s32.totalorder %s19, 0
      %p61 = por %p59, %p60
      %p62 = scmp.ne.s32.totalorder %s50, %s51
      %p63 = scmp.eq.s32.totalorder %s20, 1
      %p64 = por %p62, %p63
      %p66 = scmp.ne.s32.totalorder %s51, %s65
      %p67 = scmp.eq.s32.totalorder %s20, 0
      %p68 = por %p66, %p67
      %s70 = sadd.s32 %s69, 1
      %p73 = scmp.eq.s32.totalorder %s14, 1
      %p74 = scmp.ne.s32.totalorder %s69, %s71
      %p75 = scmp.eq.s32.totalorder %s14, 0
      %p76 = por %p74, %p75
      %p77 = scmp.ne.s32.totalorder %s69, %s71
      %p78 = scmp.eq.s32.totalorder %s19, 1
      %p79 = por %p77, %p78
      %p80 = scmp.ne.s32.totalorder %s71, %s72
      %p81 = scmp.eq.s32.totalorder %s19, 0
      %p82 = por %p80, %p81
      %p83 = scmp.ne.s32.totalorder %s71, %s72
      %p84 = scmp.eq.s32.totalorder %s20, 1
      %p85 = por %p83, %p84
      %p87 = scmp.ne.s32.totalorder %s72, %s86
      %p88 = scmp.eq.s32.totalorder %s20, 0
      %p89 = por %p87, %p88
      %s91 = sadd.s32 %s90, 1
      %p94 = scmp.eq.s32.totalorder %s14, 1
      %p95 = scmp.ne.s32.totalorder %s90, %s92
      %p96 = scmp.eq.s32.totalorder %s14, 0
      %p97 = por %p95, %p96
      %p98 = scmp.ne.s32.totalorder %s90, %s92
      %p99 = scmp.eq.s32.totalorder %s19, 1
      %p100 = por %p98, %p99
      %p101 = scmp.ne.s32.totalorder %s92, %s93
      %p102 = scmp.eq.s32.totalorder %s19, 0
      %p103 = por %p101, %p102
      %p104 = scmp.ne.s32.totalorder %s92, %s93
      %p105 = scmp.eq.s32.totalorder %s20, 1
      %p106 = por %p104, %p105
      %p108 = scmp.ne.s32.totalorder %s93, %s107
      %p109 = scmp.eq.s32.totalorder %s20, 0
      %p110 = por %p108, %p109
      %s112 = sadd.s32 %s111, 1
      %p115 = scmp.eq.s32.totalorder %s14, 1
      %p116 = scmp.ne.s32.totalorder %s111, %s113
      %p117 = scmp.eq.s32.totalorder %s14, 0
      %p118 = por %p116, %p117
      %p119 = scmp.ne.s32.totalorder %s111, %s113
      %p120 = scmp.eq.s32.totalorder %s19, 1
      %p121 = por %p119, %p120
      %p122 = scmp.ne.s32.totalorder %s113, %s114
      %p123 = scmp.eq.s32.totalorder %s19, 0
      %p124 = por %p122, %p123
      %p125 = scmp.ne.s32.totalorder %s113, %s114
      %p126 = scmp.eq.s32.totalorder %s20, 1
      %p127 = por %p125, %p126
      %p129 = scmp.ne.s32.totalorder %s114, %s128
      %p130 = scmp.eq.s32.totalorder %s20, 0
      %p131 = por %p129, %p130
      %s132 = ssub.s32 %s14, %s21
      %p133 = scmp.eq.s32.totalorder %s132, 0
      %s135 = sadd.s32 %s134, 1
      %s136 = scalar_select %p133, %s134, %s135
      %p139 = pneg %p133
      %p140 = scmp.eq.s32.totalorder %s14, 1
      %p141 = por %p139, %p140
      %p142 = scmp.ne.s32.totalorder %s134, %s137
      %p143 = scmp.eq.s32.totalorder %s14, 0
      %p144 = por %p142, %p143
      %p145 = scmp.ne.s32.totalorder %s134, %s137
      %p146 = scmp.eq.s32.totalorder %s19, 1
      %p147 = por %p145, %p146
      %p148 = scmp.ne.s32.totalorder %s137, %s138
      %p149 = scmp.eq.s32.totalorder %s19, 0
      %p150 = por %p148, %p149
      %p151 = scmp.ne.s32.totalorder %s137, %s138
      %p152 = scmp.eq.s32.totalorder %s20, 1
      %p153 = por %p151, %p152
      %p155 = scmp.ne.s32.totalorder %s138, %s154
      %p156 = scmp.eq.s32.totalorder %s20, 0
      %p157 = por %p155, %p156
      %p158 = scmp.le.s32.totalorder 1, %s14
      %p159 = scmp.lt.s32.totalorder %s14, 3
      %p160 = pnand %p158, %p159
      %p161 = pneg %p160
      // Predicated region
      $region9: #{tpu_custom_call.1} parent=5 // pred_check
        _
      $region10: #{tpu_custom_call.1} parent=5 // pred_check_branch
        %163 = sbr.rel (%p160) target = $region12
      $region11: #{tpu_custom_call.1} parent=5 // pred_region
        %s164 = ssub.s32 %s14, 1
        // Predicated region
        $region13: #{tpu_custom_call.1} parent=11 // pred_check
          %p165 = pneg %p61
        $region14: #{tpu_custom_call.1} parent=11 // pred_check_branch
          %167 = sbr.rel (%p165) target = $region16
        $region15: #{tpu_custom_call.1} parent=11 // pred_region
          _
        $region16: #{tpu_custom_call.1} parent=11 // pred_fallthru
          _
        // Predicated region
        $region17: #{tpu_custom_call.1} parent=11 // pred_check
          %p168 = pneg %p82
        $region18: #{tpu_custom_call.1} parent=11 // pred_check_branch
          %170 = sbr.rel (%p168) target = $region20
        $region19: #{tpu_custom_call.1} parent=11 // pred_region
          _
        $region20: #{tpu_custom_call.1} parent=11 // pred_fallthru
          _
        // Predicated region
        $region21: #{tpu_custom_call.1} parent=11 // pred_check
          %p171 = pneg %p103
        $region22: #{tpu_custom_call.1} parent=11 // pred_check_branch
          %173 = sbr.rel (%p171) target = $region24
        $region23: #{tpu_custom_call.1} parent=11 // pred_region
          _
        $region24: #{tpu_custom_call.1} parent=11 // pred_fallthru
          _
        // Predicated region
        $region25: #{tpu_custom_call.1} parent=11 // pred_check
          %p174 = pneg %p124
        $region26: #{tpu_custom_call.1} parent=11 // pred_check_branch
          %176 = sbr.rel (%p174) target = $region28
        $region27: #{tpu_custom_call.1} parent=11 // pred_region
          _
        $region28: #{tpu_custom_call.1} parent=11 // pred_fallthru
          _
      $region12: #{tpu_custom_call.1} parent=5 // pred_fallthru
        _
      %p177 = scmp.lt.s32.totalorder %s14, 2
      // Predicated region
      $region29: #{tpu_custom_call.1} parent=5 // pred_check
        %p178 = pneg %p177
      $region30: #{tpu_custom_call.1} parent=5 // pred_check_branch
        %180 = sbr.rel (%p178) target = $region32
      $region31: #{tpu_custom_call.1} parent=5 // pred_region
        // Predicated region
        $region33: #{tpu_custom_call.1} parent=31 // pred_check
          %p181 = pneg %p34
        $region34: #{tpu_custom_call.1} parent=31 // pred_check_branch
          %183 = sbr.rel (%p181) target = $region36
        $region35: #{tpu_custom_call.1} parent=31 // pred_region
          %p184 = scmp.lt.s32.totalorder %s14, 1
          %s185 = scalar_select %p184, %s14, 1
          %s186 = smul.addr %s185, 2
          %s187 = smul.addr %s186, 8
          %s188 = scalar_lea.vmem %s0, %s187
        $region36: #{tpu_custom_call.1} parent=31 // pred_fallthru
          _
      $region32: #{tpu_custom_call.1} parent=5 // pred_fallthru
        _
      %p189 = scmp.le.s32.totalorder 1, %s14
      %p190 = scmp.lt.s32.totalorder %s14, 3
      %p191 = pnand %p189, %p190
      %p192 = pneg %p191
      // Predicated region
      $region37: #{tpu_custom_call.1} parent=5 // pred_check
        _
      $region38: #{tpu_custom_call.1} parent=5 // pred_check_branch
        %194 = sbr.rel (%p191) target = $region40
      $region39: #{tpu_custom_call.1} parent=5 // pred_region
        %s195 = ssub.s32 %s14, 1
        %p196 = scmp.lt.s32.totalorder %s19, 1
        %s197 = scalar_select %p196, %s19, 1
        %s198 = smul.addr %s197, 2
        %s199 = smul.addr %s198, 8
        %s200 = scalar_lea.vmem %s0, %s199
        %p201 = pneg %p40
        %p202 = pneg %p37
        %p203 = pneg %p61
        %p204 = pneg %p58
        %p205 = pneg %p82
        %p206 = pneg %p79
        %p207 = pneg %p103
        %p208 = pneg %p100
        %p209 = pneg %p124
        %p210 = pneg %p121
        %p211 = pneg %p150
        %p212 = pneg %p147
        %s213 = sand.u32 %s137, 1
        %s214 = scalar_lea.sflag [#allocation4], %s213
        %s215 = sand.u32 %s137, 1
        %s216 = smul.addr %s215, 16
        %s217 = scalar_lea.vmem [#allocation3], %s216
        %p218 = scmp.lt.s32.totalorder %s19, 1
        %s219 = scalar_select %p218, %s19, 1
        %s220 = smul.addr %s219, 2
        %s221 = smul.addr %s220, 8
        %s222 = scalar_lea.vmem %s0, %s221
        %vm223 = vcmask 588800
        %224 = vst.msk [vmem:[#allocation2] sm:$0xff] %vm223, 0.0
        %225 = vst.msk [vmem:[#allocation2 + $0x8] sm:$0xff] %vm223, 0.0
        %vm226 = vcmask 582656
        %227 = vst.msk [vmem:[#allocation2 + $0x10] sm:$0x3] %vm226, 0.0
        %v228 = vld [vmem:[%s222] sm:$0xff]
        %v229 = vld [vmem:[%s222 + $0x8] sm:$0xff]
        %232 = vrot.lane.b32.xlu0 %v228, 4
        %v233 = vpop.permute.xlu0 %232
        %234 = vrot.lane.b32.xlu0 %v229, 4
        %v235 = vpop.permute.xlu0 %234
        %vm238 = vcmask 556064
        %239 = vst.msk [vmem:[#allocation2 + $0x1] sm:$0xff] %vm238, %v233
        %240 = vst.msk [vmem:[#allocation2 + $0x9] sm:$0xff] %vm238, %v235
        %v241 = vld [vmem:[#allocation2] sm:$0xff]
        %v242 = vld [vmem:[#allocation2 + $0x8] sm:$0xff]
        %v243 = vld [vmem:[%s1] sm:$0xff]
        %v244 = vld [vmem:[%s1 + $0x8] sm:$0xff]
        %v245 = vld [vmem:[%s1 + $0x10] sm:$0xff]
        %v246 = vld [vmem:[%s1 + $0x18] sm:$0xff]
        %v247 = vld [vmem:[%s1 + $0x20] sm:$0xff]
        %v248 = vld [vmem:[%s1 + $0x28] sm:$0xff]
        %v249 = vld [vmem:[%s1 + $0x30] sm:$0xff]
        %v250 = vld [vmem:[%s1 + $0x38] sm:$0xff]
        %v251 = vld [vmem:[%s1 + $0x40] sm:$0xff]
        %v252 = vld [vmem:[#allocation2 + $0x1] sm:$0xff]
        %v253 = vld [vmem:[#allocation2 + $0x9] sm:$0xff]
        %s254 = scalar_lea.vmem %s1, 72
        %v255 = vld [vmem:[%s254] sm:$0xff]
        %v256 = vld [vmem:[%s254 + $0x8] sm:$0xff]
        %v257 = vld [vmem:[%s254 + $0x10] sm:$0xff]
        %v258 = vld [vmem:[%s254 + $0x18] sm:$0xff]
        %v259 = vld [vmem:[%s254 + $0x20] sm:$0xff]
        %v260 = vld [vmem:[%s254 + $0x28] sm:$0xff]
        %v261 = vld [vmem:[%s254 + $0x30] sm:$0xff]
        %v262 = vld [vmem:[%s254 + $0x38] sm:$0xff]
        %v263 = vld [vmem:[%s254 + $0x40] sm:$0xff]
        %v265 = vsel %vm223, %v252, 0
        %v268 = vsel %vm223, %v253, 0
        %270 = vmatpush.msra.mxu0 0.0
        %271 = vmatpush.msra.mxu0 0.0
        %272 = vmatpush.msra.mxu0 0.0
        %273 = vmatpush.msra.mxu0 0.0
        %274 = vmatpush.msra.mxu0 0.0
        %275 = vmatpush.msra.mxu0 0.0
        %276 = vmatpush.msra.mxu0 0.0
        %277 = vmatpush.msra.mxu0 %v263
        %278 = vmatpush.msra.mxu0 %v262
        %279 = vmatpush.msra.mxu0 %v261
        %280 = vmatpush.msra.mxu0 %v260
        %281 = vmatpush.msra.mxu0 %v259
        %282 = vmatpush.msra.mxu0 %v258
        %283 = vmatpush.msra.mxu0 %v257
        %284 = vmatpush.msra.mxu0 %v256
        %285 = vmatpush.msra.mxu0 %v255
        %286 = vmatmul.f32.gmra.mxu0 %v265
        %v287 = vpop.f32.mrf.mxu0
        %v288 = vadd.f32 0.0, %v287
        %289 = vmatmul.f32.gmra.mxu0 %v268
        %v290 = vpop.f32.mrf.mxu0
        %v291 = vadd.f32 0.0, %v290
        %292 = vdwg.mxu0
        %v294 = vsel %vm223, %v241, 0
        %v297 = vsel %vm223, %v242, 0
        %299 = vmatpush.msra.mxu0 0.0
        %300 = vmatpush.msra.mxu0 0.0
        %301 = vmatpush.msra.mxu0 0.0
        %302 = vmatpush.msra.mxu0 0.0
        %303 = vmatpush.msra.mxu0 0.0
        %304 = vmatpush.msra.mxu0 0.0
        %305 = vmatpush.msra.mxu0 0.0
        %306 = vmatpush.msra.mxu0 %v251
        %307 = vmatpush.msra.mxu0 %v250
        %308 = vmatpush.msra.mxu0 %v249
        %309 = vmatpush.msra.mxu0 %v248
        %310 = vmatpush.msra.mxu0 %v247
        %311 = vmatpush.msra.mxu0 %v246
        %312 = vmatpush.msra.mxu0 %v245
        %313 = vmatpush.msra.mxu0 %v244
        %314 = vmatpush.msra.mxu0 %v243
        %315 = vmatmul.f32.gmra.mxu0 %v294
        %v316 = vpop.f32.mrf.mxu0
        %v317 = vadd.f32 %v288, %v316
        %318 = vmatmul.f32.gmra.mxu0 %v297
        %v319 = vpop.f32.mrf.mxu0
        %v320 = vadd.f32 %v291, %v319
        %321 = vdwg.mxu0
        %v322 = vld [vmem:[#allocation2 + $0x2] sm:$0xff]
        %v323 = vld [vmem:[#allocation2 + $0xa] sm:$0xff]
        %s324 = scalar_lea.vmem %s1, 144
        %v325 = vld [vmem:[%s324] sm:$0xff]
        %v326 = vld [vmem:[%s324 + $0x8] sm:$0xff]
        %v327 = vld [vmem:[%s324 + $0x10] sm:$0xff]
        %v328 = vld [vmem:[%s324 + $0x18] sm:$0xff]
        %v329 = vld [vmem:[%s324 + $0x20] sm:$0xff]
        %v330 = vld [vmem:[%s324 + $0x28] sm:$0xff]
        %v331 = vld [vmem:[%s324 + $0x30] sm:$0xff]
        %v332 = vld [vmem:[%s324 + $0x38] sm:$0xff]
        %v333 = vld [vmem:[%s324 + $0x40] sm:$0xff]
        %v335 = vsel %vm223, %v322, 0
        %v338 = vsel %vm223, %v323, 0
        %340 = vmatpush.msra.mxu0 0.0
        %341 = vmatpush.msra.mxu0 0.0
        %342 = vmatpush.msra.mxu0 0.0
        %343 = vmatpush.msra.mxu0 0.0
        %344 = vmatpush.msra.mxu0 0.0
        %345 = vmatpush.msra.mxu0 0.0
        %346 = vmatpush.msra.mxu0 0.0
        %347 = vmatpush.msra.mxu0 %v333
        %348 = vmatpush.msra.mxu0 %v332
        %349 = vmatpush.msra.mxu0 %v331
        %350 = vmatpush.msra.mxu0 %v330
        %351 = vmatpush.msra.mxu0 %v329
        %352 = vmatpush.msra.mxu0 %v328
        %353 = vmatpush.msra.mxu0 %v327
        %354 = vmatpush.msra.mxu0 %v326
        %355 = vmatpush.msra.mxu0 %v325
        %356 = vmatmul.f32.gmra.mxu0 %v335
        %v357 = vpop.f32.mrf.mxu0
        %v358 = vadd.f32 0.0, %v357
        %359 = vmatmul.f32.gmra.mxu0 %v338
        %v360 = vpop.f32.mrf.mxu0
        %v361 = vadd.f32 0.0, %v360
        %362 = vdwg.mxu0
        %v363 = vadd.f32 %v317, %v358
        %v364 = vadd.f32 %v320, %v361
        %v365 = vld [vmem:[%s2] sm:$0x1]
        %v367 = vperm.slane %v365, 0
        %v369 = vadd.f32 %v363, %v367
        %v370 = vadd.f32 %v364, %v367
        %v371 = vmax.f32 %v369, 0.0
        %v372 = vmax.f32 %v370, 0.0
        %375 = vrot.lane.b32.xlu0 %v371, 4
        %v376 = vpop.permute.xlu0 %375
        %377 = vrot.lane.b32.xlu0 %v372, 4
        %v378 = vpop.permute.xlu0 %377
        %381 = vst.msk [vmem:[#allocation2 + $0x1] sm:$0xff] %vm238, %v376
        %382 = vst.msk [vmem:[#allocation2 + $0x9] sm:$0xff] %vm238, %v378
        %v383 = vld [vmem:[#allocation2] sm:$0xff]
        %v384 = vld [vmem:[#allocation2 + $0x8] sm:$0xff]
        %v385 = vld [vmem:[%s3] sm:$0xff]
        %v386 = vld [vmem:[%s3 + $0x8] sm:$0xff]
        %v387 = vld [vmem:[%s3 + $0x10] sm:$0xff]
        %v388 = vld [vmem:[%s3 + $0x18] sm:$0xff]
        %v389 = vld [vmem:[%s3 + $0x20] sm:$0xff]
        %v390 = vld [vmem:[%s3 + $0x28] sm:$0xff]
        %v391 = vld [vmem:[%s3 + $0x30] sm:$0xff]
        %v392 = vld [vmem:[%s3 + $0x38] sm:$0xff]
        %v393 = vld [vmem:[%s3 + $0x40] sm:$0xff]
        %v394 = vld [vmem:[#allocation2 + $0x1] sm:$0xff]
        %v395 = vld [vmem:[#allocation2 + $0x9] sm:$0xff]
        %s396 = scalar_lea.vmem %s3, 72
        %v397 = vld [vmem:[%s396] sm:$0xff]
        %v398 = vld [vmem:[%s396 + $0x8] sm:$0xff]
        %v399 = vld [vmem:[%s396 + $0x10] sm:$0xff]
        %v400 = vld [vmem:[%s396 + $0x18] sm:$0xff]
        %v401 = vld [vmem:[%s396 + $0x20] sm:$0xff]
        %v402 = vld [vmem:[%s396 + $0x28] sm:$0xff]
        %v403 = vld [vmem:[%s396 + $0x30] sm:$0xff]
        %v404 = vld [vmem:[%s396 + $0x38] sm:$0xff]
        %v405 = vld [vmem:[%s396 + $0x40] sm:$0xff]
        %v407 = vsel %vm223, %v394, 0
        %v410 = vsel %vm223, %v395, 0
        %412 = vmatpush.msra.mxu0 0.0
        %413 = vmatpush.msra.mxu0 0.0
        %414 = vmatpush.msra.mxu0 0.0
        %415 = vmatpush.msra.mxu0 0.0
        %416 = vmatpush.msra.mxu0 0.0
        %417 = vmatpush.msra.mxu0 0.0
        %418 = vmatpush.msra.mxu0 0.0
        %419 = vmatpush.msra.mxu0 %v405
        %420 = vmatpush.msra.mxu0 %v404
        %421 = vmatpush.msra.mxu0 %v403
        %422 = vmatpush.msra.mxu0 %v402
        %423 = vmatpush.msra.mxu0 %v401
        %424 = vmatpush.msra.mxu0 %v400
        %425 = vmatpush.msra.mxu0 %v399
        %426 = vmatpush.msra.mxu0 %v398
        %427 = vmatpush.msra.mxu0 %v397
        %428 = vmatmul.f32.gmra.mxu0 %v407
        %v429 = vpop.f32.mrf.mxu0
        %v430 = vadd.f32 0.0, %v429
        %431 = vmatmul.f32.gmra.mxu0 %v410
        %v432 = vpop.f32.mrf.mxu0
        %v433 = vadd.f32 0.0, %v432
        %434 = vdwg.mxu0
        %v436 = vsel %vm223, %v383, 0
        %v439 = vsel %vm223, %v384, 0
        %441 = vmatpush.msra.mxu0 0.0
        %442 = vmatpush.msra.mxu0 0.0
        %443 = vmatpush.msra.mxu0 0.0
        %444 = vmatpush.msra.mxu0 0.0
        %445 = vmatpush.msra.mxu0 0.0
        %446 = vmatpush.msra.mxu0 0.0
        %447 = vmatpush.msra.mxu0 0.0
        %448 = vmatpush.msra.mxu0 %v393
        %449 = vmatpush.msra.mxu0 %v392
        %450 = vmatpush.msra.mxu0 %v391
        %451 = vmatpush.msra.mxu0 %v390
        %452 = vmatpush.msra.mxu0 %v389
        %453 = vmatpush.msra.mxu0 %v388
        %454 = vmatpush.msra.mxu0 %v387
        %455 = vmatpush.msra.mxu0 %v386
        %456 = vmatpush.msra.mxu0 %v385
        %457 = vmatmul.f32.gmra.mxu0 %v436
        %v458 = vpop.f32.mrf.mxu0
        %v459 = vadd.f32 %v430, %v458
        %460 = vmatmul.f32.gmra.mxu0 %v439
        %v461 = vpop.f32.mrf.mxu0
        %v462 = vadd.f32 %v433, %v461
        %463 = vdwg.mxu0
        %v464 = vld [vmem:[#allocation2 + $0x2] sm:$0xff]
        %v465 = vld [vmem:[#allocation2 + $0xa] sm:$0xff]
        %s466 = scalar_lea.vmem %s3, 144
        %v467 = vld [vmem:[%s466] sm:$0xff]
        %v468 = vld [vmem:[%s466 + $0x8] sm:$0xff]
        %v469 = vld [vmem:[%s466 + $0x10] sm:$0xff]
        %v470 = vld [vmem:[%s466 + $0x18] sm:$0xff]
        %v471 = vld [vmem:[%s466 + $0x20] sm:$0xff]
        %v472 = vld [vmem:[%s466 + $0x28] sm:$0xff]
        %v473 = vld [vmem:[%s466 + $0x30] sm:$0xff]
        %v474 = vld [vmem:[%s466 + $0x38] sm:$0xff]
        %v475 = vld [vmem:[%s466 + $0x40] sm:$0xff]
        %v477 = vsel %vm223, %v464, 0
        %v480 = vsel %vm223, %v465, 0
        %482 = vmatpush.msra.mxu0 0.0
        %483 = vmatpush.msra.mxu0 0.0
        %484 = vmatpush.msra.mxu0 0.0
        %485 = vmatpush.msra.mxu0 0.0
        %486 = vmatpush.msra.mxu0 0.0
        %487 = vmatpush.msra.mxu0 0.0
        %488 = vmatpush.msra.mxu0 0.0
        %489 = vmatpush.msra.mxu0 %v475
        %490 = vmatpush.msra.mxu0 %v474
        %491 = vmatpush.msra.mxu0 %v473
        %492 = vmatpush.msra.mxu0 %v472
        %493 = vmatpush.msra.mxu0 %v471
        %494 = vmatpush.msra.mxu0 %v470
        %495 = vmatpush.msra.mxu0 %v469
        %496 = vmatpush.msra.mxu0 %v468
        %497 = vmatpush.msra.mxu0 %v467
        %498 = vmatmul.f32.gmra.mxu0 %v477
        %v499 = vpop.f32.mrf.mxu0
        %v500 = vadd.f32 0.0, %v499
        %501 = vmatmul.f32.gmra.mxu0 %v480
        %v502 = vpop.f32.mrf.mxu0
        %v503 = vadd.f32 0.0, %v502
        %504 = vdwg.mxu0
        %v505 = vadd.f32 %v459, %v500
        %v506 = vadd.f32 %v462, %v503
        %v507 = vld [vmem:[%s4] sm:$0x1]
        %v509 = vperm.slane %v507, 0
        %v511 = vadd.f32 %v505, %v509
        %v512 = vadd.f32 %v506, %v509
        %v513 = vadd.f32 %v511, %v228
        %v514 = vadd.f32 %v512, %v229
        %v515 = vmax.f32 %v513, 0.0
        %v516 = vmax.f32 %v514, 0.0
        %519 = vrot.lane.b32.xlu0 %v515, 4
        %v520 = vpop.permute.xlu0 %519
        %521 = vrot.lane.b32.xlu0 %v516, 4
        %v522 = vpop.permute.xlu0 %521
        %525 = vst.msk [vmem:[#allocation2 + $0x1] sm:$0xff] %vm238, %v520
        %526 = vst.msk [vmem:[#allocation2 + $0x9] sm:$0xff] %vm238, %v522
        %v527 = vld [vmem:[#allocation2] sm:$0xff]
        %v528 = vld [vmem:[#allocation2 + $0x8] sm:$0xff]
        %s529 = scalar_lea.vmem %s1, 216
        %v530 = vld [vmem:[%s529] sm:$0xff]
        %v531 = vld [vmem:[%s529 + $0x8] sm:$0xff]
        %v532 = vld [vmem:[%s529 + $0x10] sm:$0xff]
        %v533 = vld [vmem:[%s529 + $0x18] sm:$0xff]
        %v534 = vld [vmem:[%s529 + $0x20] sm:$0xff]
        %v535 = vld [vmem:[%s529 + $0x28] sm:$0xff]
        %v536 = vld [vmem:[%s529 + $0x30] sm:$0xff]
        %v537 = vld [vmem:[%s529 + $0x38] sm:$0xff]
        %v538 = vld [vmem:[%s529 + $0x40] sm:$0xff]
        %v539 = vld [vmem:[#allocation2 + $0x1] sm:$0xff]
        %v540 = vld [vmem:[#allocation2 + $0x9] sm:$0xff]
        %s541 = scalar_lea.vmem %s1, 288
        %v542 = vld [vmem:[%s541] sm:$0xff]
        %v543 = vld [vmem:[%s541 + $0x8] sm:$0xff]
        %v544 = vld [vmem:[%s541 + $0x10] sm:$0xff]
        %v545 = vld [vmem:[%s541 + $0x18] sm:$0xff]
        %v546 = vld [vmem:[%s541 + $0x20] sm:$0xff]
        %v547 = vld [vmem:[%s541 + $0x28] sm:$0xff]
        %v548 = vld [vmem:[%s541 + $0x30] sm:$0xff]
        %v549 = vld [vmem:[%s541 + $0x38] sm:$0xff]
        %v550 = vld [vmem:[%s541 + $0x40] sm:$0xff]
        %v552 = vsel %vm223, %v539, 0
        %v555 = vsel %vm223, %v540, 0
        %557 = vmatpush.msra.mxu0 0.0
        %558 = vmatpush.msra.mxu0 0.0
        %559 = vmatpush.msra.mxu0 0.0
        %560 = vmatpush.msra.mxu0 0.0
        %561 = vmatpush.msra.mxu0 0.0
        %562 = vmatpush.msra.mxu0 0.0
        %563 = vmatpush.msra.mxu0 0.0
        %564 = vmatpush.msra.mxu0 %v550
        %565 = vmatpush.msra.mxu0 %v549
        %566 = vmatpush.msra.mxu0 %v548
        %567 = vmatpush.msra.mxu0 %v547
        %568 = vmatpush.msra.mxu0 %v546
        %569 = vmatpush.msra.mxu0 %v545
        %570 = vmatpush.msra.mxu0 %v544
        %571 = vmatpush.msra.mxu0 %v543
        %572 = vmatpush.msra.mxu0 %v542
        %573 = vmatmul.f32.gmra.mxu0 %v552
        %v574 = vpop.f32.mrf.mxu0
        %v575 = vadd.f32 0.0, %v574
        %576 = vmatmul.f32.gmra.mxu0 %v555
        %v577 = vpop.f32.mrf.mxu0
        %v578 = vadd.f32 0.0, %v577
        %579 = vdwg.mxu0
        %v581 = vsel %vm223, %v527, 0
        %v584 = vsel %vm223, %v528, 0
        %586 = vmatpush.msra.mxu0 0.0
        %587 = vmatpush.msra.mxu0 0.0
        %588 = vmatpush.msra.mxu0 0.0
        %589 = vmatpush.msra.mxu0 0.0
        %590 = vmatpush.msra.mxu0 0.0
        %591 = vmatpush.msra.mxu0 0.0
        %592 = vmatpush.msra.mxu0 0.0
        %593 = vmatpush.msra.mxu0 %v538
        %594 = vmatpush.msra.mxu0 %v537
        %595 = vmatpush.msra.mxu0 %v536
        %596 = vmatpush.msra.mxu0 %v535
        %597 = vmatpush.msra.mxu0 %v534
        %598 = vmatpush.msra.mxu0 %v533
        %599 = vmatpush.msra.mxu0 %v532
        %600 = vmatpush.msra.mxu0 %v531
        %601 = vmatpush.msra.mxu0 %v530
        %602 = vmatmul.f32.gmra.mxu0 %v581
        %v603 = vpop.f32.mrf.mxu0
        %v604 = vadd.f32 %v575, %v603
        %605 = vmatmul.f32.gmra.mxu0 %v584
        %v606 = vpop.f32.mrf.mxu0
        %v607 = vadd.f32 %v578, %v606
        %608 = vdwg.mxu0
        %v609 = vld [vmem:[#allocation2 + $0x2] sm:$0xff]
        %v610 = vld [vmem:[#allocation2 + $0xa] sm:$0xff]
        %s611 = scalar_lea.vmem %s1, 360
        %v612 = vld [vmem:[%s611] sm:$0xff]
        %v613 = vld [vmem:[%s611 + $0x8] sm:$0xff]
        %v614 = vld [vmem:[%s611 + $0x10] sm:$0xff]
        %v615 = vld [vmem:[%s611 + $0x18] sm:$0xff]
        %v616 = vld [vmem:[%s611 + $0x20] sm:$0xff]
        %v617 = vld [vmem:[%s611 + $0x28] sm:$0xff]
        %v618 = vld [vmem:[%s611 + $0x30] sm:$0xff]
        %v619 = vld [vmem:[%s611 + $0x38] sm:$0xff]
        %v620 = vld [vmem:[%s611 + $0x40] sm:$0xff]
        %v622 = vsel %vm223, %v609, 0
        %v625 = vsel %vm223, %v610, 0
        %627 = vmatpush.msra.mxu0 0.0
        %628 = vmatpush.msra.mxu0 0.0
        %629 = vmatpush.msra.mxu0 0.0
        %630 = vmatpush.msra.mxu0 0.0
        %631 = vmatpush.msra.mxu0 0.0
        %632 = vmatpush.msra.mxu0 0.0
        %633 = vmatpush.msra.mxu0 0.0
        %634 = vmatpush.msra.mxu0 %v620
        %635 = vmatpush.msra.mxu0 %v619
        %636 = vmatpush.msra.mxu0 %v618
        %637 = vmatpush.msra.mxu0 %v617
        %638 = vmatpush.msra.mxu0 %v616
        %639 = vmatpush.msra.mxu0 %v615
        %640 = vmatpush.msra.mxu0 %v614
        %641 = vmatpush.msra.mxu0 %v613
        %642 = vmatpush.msra.mxu0 %v612
        %643 = vmatmul.f32.gmra.mxu0 %v622
        %v644 = vpop.f32.mrf.mxu0
        %v645 = vadd.f32 0.0, %v644
        %646 = vmatmul.f32.gmra.mxu0 %v625
        %v647 = vpop.f32.mrf.mxu0
        %v648 = vadd.f32 0.0, %v647
        %649 = vdwg.mxu0
        %v650 = vadd.f32 %v604, %v645
        %v651 = vadd.f32 %v607, %v648
        %s652 = scalar_lea.vmem %s2, 1
        %v653 = vld [vmem:[%s652] sm:$0x1]
        %v655 = vperm.slane %v653, 0
        %v657 = vadd.f32 %v650, %v655
        %v658 = vadd.f32 %v651, %v655
        %v659 = vmax.f32 %v657, 0.0
        %v660 = vmax.f32 %v658, 0.0
        %663 = vrot.lane.b32.xlu0 %v659, 4
        %v664 = vpop.permute.xlu0 %663
        %665 = vrot.lane.b32.xlu0 %v660, 4
        %v666 = vpop.permute.xlu0 %665
        %669 = vst.msk [vmem:[#allocation2 + $0x1] sm:$0xff] %vm238, %v664
        %670 = vst.msk [vmem:[#allocation2 + $0x9] sm:$0xff] %vm238, %v666
        %v671 = vld [vmem:[#allocation2] sm:$0xff]
        %v672 = vld [vmem:[#allocation2 + $0x8] sm:$0xff]
        %s673 = scalar_lea.vmem %s3, 216
        %v674 = vld [vmem:[%s673] sm:$0xff]
        %v675 = vld [vmem:[%s673 + $0x8] sm:$0xff]
        %v676 = vld [vmem:[%s673 + $0x10] sm:$0xff]
        %v677 = vld [vmem:[%s673 + $0x18] sm:$0xff]
        %v678 = vld [vmem:[%s673 + $0x20] sm:$0xff]
        %v679 = vld [vmem:[%s673 + $0x28] sm:$0xff]
        %v680 = vld [vmem:[%s673 + $0x30] sm:$0xff]
        %v681 = vld [vmem:[%s673 + $0x38] sm:$0xff]
        %v682 = vld [vmem:[%s673 + $0x40] sm:$0xff]
        %v683 = vld [vmem:[#allocation2 + $0x1] sm:$0xff]
        %v684 = vld [vmem:[#allocation2 + $0x9] sm:$0xff]
        %s685 = scalar_lea.vmem %s3, 288
        %v686 = vld [vmem:[%s685] sm:$0xff]
        %v687 = vld [vmem:[%s685 + $0x8] sm:$0xff]
        %v688 = vld [vmem:[%s685 + $0x10] sm:$0xff]
        %v689 = vld [vmem:[%s685 + $0x18] sm:$0xff]
        %v690 = vld [vmem:[%s685 + $0x20] sm:$0xff]
        %v691 = vld [vmem:[%s685 + $0x28] sm:$0xff]
        %v692 = vld [vmem:[%s685 + $0x30] sm:$0xff]
        %v693 = vld [vmem:[%s685 + $0x38] sm:$0xff]
        %v694 = vld [vmem:[%s685 + $0x40] sm:$0xff]
        %v696 = vsel %vm223, %v683, 0
        %v699 = vsel %vm223, %v684, 0
        %701 = vmatpush.msra.mxu0 0.0
        %702 = vmatpush.msra.mxu0 0.0
        %703 = vmatpush.msra.mxu0 0.0
        %704 = vmatpush.msra.mxu0 0.0
        %705 = vmatpush.msra.mxu0 0.0
        %706 = vmatpush.msra.mxu0 0.0
        %707 = vmatpush.msra.mxu0 0.0
        %708 = vmatpush.msra.mxu0 %v694
        %709 = vmatpush.msra.mxu0 %v693
        %710 = vmatpush.msra.mxu0 %v692
        %711 = vmatpush.msra.mxu0 %v691
        %712 = vmatpush.msra.mxu0 %v690
        %713 = vmatpush.msra.mxu0 %v689
        %714 = vmatpush.msra.mxu0 %v688
        %715 = vmatpush.msra.mxu0 %v687
        %716 = vmatpush.msra.mxu0 %v686
        %717 = vmatmul.f32.gmra.mxu0 %v696
        %v718 = vpop.f32.mrf.mxu0
        %v719 = vadd.f32 0.0, %v718
        %720 = vmatmul.f32.gmra.mxu0 %v699
        %v721 = vpop.f32.mrf.mxu0
        %v722 = vadd.f32 0.0, %v721
        %723 = vdwg.mxu0
        %v725 = vsel %vm223, %v671, 0
        %v728 = vsel %vm223, %v672, 0
        %730 = vmatpush.msra.mxu0 0.0
        %731 = vmatpush.msra.mxu0 0.0
        %732 = vmatpush.msra.mxu0 0.0
        %733 = vmatpush.msra.mxu0 0.0
        %734 = vmatpush.msra.mxu0 0.0
        %735 = vmatpush.msra.mxu0 0.0
        %736 = vmatpush.msra.mxu0 0.0
        %737 = vmatpush.msra.mxu0 %v682
        %738 = vmatpush.msra.mxu0 %v681
        %739 = vmatpush.msra.mxu0 %v680
        %740 = vmatpush.msra.mxu0 %v679
        %741 = vmatpush.msra.mxu0 %v678
        %742 = vmatpush.msra.mxu0 %v677
        %743 = vmatpush.msra.mxu0 %v676
        %744 = vmatpush.msra.mxu0 %v675
        %745 = vmatpush.msra.mxu0 %v674
        %746 = vmatmul.f32.gmra.mxu0 %v725
        %v747 = vpop.f32.mrf.mxu0
        %v748 = vadd.f32 %v719, %v747
        %749 = vmatmul.f32.gmra.mxu0 %v728
        %v750 = vpop.f32.mrf.mxu0
        %v751 = vadd.f32 %v722, %v750
        %752 = vdwg.mxu0
        %v753 = vld [vmem:[#allocation2 + $0x2] sm:$0xff]
        %v754 = vld [vmem:[#allocation2 + $0xa] sm:$0xff]
        %s755 = scalar_lea.vmem %s3, 360
        %v756 = vld [vmem:[%s755] sm:$0xff]
        %v757 = vld [vmem:[%s755 + $0x8] sm:$0xff]
        %v758 = vld [vmem:[%s755 + $0x10] sm:$0xff]
        %v759 = vld [vmem:[%s755 + $0x18] sm:$0xff]
        %v760 = vld [vmem:[%s755 + $0x20] sm:$0xff]
        %v761 = vld [vmem:[%s755 + $0x28] sm:$0xff]
        %v762 = vld [vmem:[%s755 + $0x30] sm:$0xff]
        %v763 = vld [vmem:[%s755 + $0x38] sm:$0xff]
        %v764 = vld [vmem:[%s755 + $0x40] sm:$0xff]
        %v766 = vsel %vm223, %v753, 0
        %v769 = vsel %vm223, %v754, 0
        %771 = vmatpush.msra.mxu0 0.0
        %772 = vmatpush.msra.mxu0 0.0
        %773 = vmatpush.msra.mxu0 0.0
        %774 = vmatpush.msra.mxu0 0.0
        %775 = vmatpush.msra.mxu0 0.0
        %776 = vmatpush.msra.mxu0 0.0
        %777 = vmatpush.msra.mxu0 0.0
        %778 = vmatpush.msra.mxu0 %v764
        %779 = vmatpush.msra.mxu0 %v763
        %780 = vmatpush.msra.mxu0 %v762
        %781 = vmatpush.msra.mxu0 %v761
        %782 = vmatpush.msra.mxu0 %v760
        %783 = vmatpush.msra.mxu0 %v759
        %784 = vmatpush.msra.mxu0 %v758
        %785 = vmatpush.msra.mxu0 %v757
        %786 = vmatpush.msra.mxu0 %v756
        %787 = vmatmul.f32.gmra.mxu0 %v766
        %v788 = vpop.f32.mrf.mxu0
        %v789 = vadd.f32 0.0, %v788
        %790 = vmatmul.f32.gmra.mxu0 %v769
        %v791 = vpop.f32.mrf.mxu0
        %v792 = vadd.f32 0.0, %v791
        %793 = vdwg.mxu0
        %v794 = vadd.f32 %v748, %v789
        %v795 = vadd.f32 %v751, %v792
        %s796 = scalar_lea.vmem %s4, 1
        %v797 = vld [vmem:[%s796] sm:$0x1]
        %v799 = vperm.slane %v797, 0
        %v801 = vadd.f32 %v794, %v799
        %v802 = vadd.f32 %v795, %v799
        %v803 = vadd.f32 %v801, %v515
        %v804 = vadd.f32 %v802, %v516
        %v805 = vmax.f32 %v803, 0.0
        %v806 = vmax.f32 %v804, 0.0
        %vm807 = vcmask 523264
        %808 = vst.msk [vmem:[%s217] sm:$0xff] %vm807, %v805
        %809 = vst.msk [vmem:[%s217 + $0x8] sm:$0xff] %vm807, %v806
        %s810 = sand.u32 %s137, 1
        %s811 = scalar_lea.sflag [#allocation4], %s810
        %s812 = sand.u32 %s137, 1
        %s813 = smul.addr %s812, 16
        %s814 = scalar_lea.vmem [#allocation3], %s813
        // Predicated region
        $region41: #{tpu_custom_call.1} parent=39 // pred_check
          %p815 = pneg %p147
        $region42: #{tpu_custom_call.1} parent=39 // pred_check_branch
          %817 = sbr.rel (%p815) target = $region44
        $region43: #{tpu_custom_call.1} parent=39 // pred_region
          %819 = vsyncadd %s811, 0
          %s820 = smul.addr %s19, 2
          %s821 = smul.addr %s820, 8
          %s822 = scalar_lea.hbm %s5, %s821
          %s823 = sshll.u32 %s814, 4
          %s824 = int_to_ptr.vmem [resolvable:$true] %s823
          %s825 = sshll.u32 %s822, 4
          %s826 = int_to_ptr.hbm [resolvable:$true] %s825
          %831 = dma.vmem_to_hbm [thread:$0]  %s824, 256, %s826, %s811, 128, 128, 8
        $region44: #{tpu_custom_call.1} parent=39 // pred_fallthru
          _
      $region40: #{tpu_custom_call.1} parent=5 // pred_fallthru
        _
      %p832 = scmp.le.s32.totalorder 2, %s14
      // Predicated region
      $region45: #{tpu_custom_call.1} parent=5 // pred_check
        %p833 = pneg %p832
      $region46: #{tpu_custom_call.1} parent=5 // pred_check_branch
        %835 = sbr.rel (%p833) target = $region48
      $region47: #{tpu_custom_call.1} parent=5 // pred_region
        %s836 = ssub.s32 %s14, 2
        // Predicated region
        $region49: #{tpu_custom_call.1} parent=47 // pred_check
          %p837 = pneg %p153
        $region50: #{tpu_custom_call.1} parent=47 // pred_check_branch
          %839 = sbr.rel (%p837) target = $region52
        $region51: #{tpu_custom_call.1} parent=47 // pred_region
          %s840 = sand.u32 %s138, 1
          %s841 = scalar_lea.sflag [#allocation4], %s840
          %s842 = sand.u32 %s138, 1
          %s843 = smul.addr %s842, 16
          %s844 = scalar_lea.vmem [#allocation3], %s843
          %846 = dma.done %s841, 256
        $region52: #{tpu_custom_call.1} parent=47 // pred_fallthru
          _
      $region48: #{tpu_custom_call.1} parent=5 // pred_fallthru
        _
    $region6: #{tpu_custom_call.1} parent=1 // loop_footer
      %s18 = sadd.s32 1, %s14
    $region7: #{tpu_custom_call.1} parent=1 // loop_footer_branch
      %13 = sbr.rel target = $region3
    $region8: #{tpu_custom_call.1} parent=1 // loop_exit
      _
    %847 = vsyncpa [#allocation4], 1
    %s848 = scalar_lea.sflag [#allocation4], 1
    %849 = vsyncpa %s848, 1

</llo_original>
